<compile_context>
chip_gen: v7x
topology: tpu7x:2x2x1
jax: 0.10.0
libtpu: 0.0.40
codegen_flags: <defaults>
</compile_context>

<pallas_src>
import functools

import jax
import jax.numpy as jnp
from jax import lax
from jax.experimental import pallas as pl
from jax.experimental.pallas import tpu as pltpu


def _lmd_loss_kernel(s_ref, t_ref, tgt_ref, lmoff_ref, out_ref, *,
                     T, beta, batch, class_axis):
    """One batch tile of CE + beta*T^2*KL(masked teacher || masked student).

    class_axis == 0 : refs are (C, TB)  -- batch lane-dense (small C)
    class_axis == 1 : refs are (TB, C)  -- class lane-dense (large C)
    """
    s = s_ref[...].astype(jnp.float32)          # student logits
    t = t_ref[...].astype(jnp.float32)          # teacher (global) logits
    ca = class_axis
    ba = 1 - ca
    inv_T = 1.0 / T

    # one-hot(target) along the class axis
    class_iota = lax.broadcasted_iota(jnp.int32, s.shape, ca)
    gt_mask = (class_iota == tgt_ref[...]).astype(jnp.float32)
    gt_off = 1000.0 * gt_mask
    t_off = gt_off + lmoff_ref[...]             # + precomputed 1000*label_mask

    # --- CrossEntropy (per batch element, un-normalised) -----------------
    m = jnp.max(s, axis=ca, keepdims=True)
    lse = jnp.log(jnp.sum(jnp.exp(s - m), axis=ca, keepdims=True)) + m
    s_gt = jnp.sum(gt_mask * s, axis=ca, keepdims=True)
    ce = lse - s_gt

    # --- lmd_criterion KL, fused (no p_t / log_p_t / log_p_s temps) ------
    z_t = t * inv_T - t_off
    m_t = jnp.max(z_t, axis=ca, keepdims=True)
    zt_shift = z_t - m_t
    e_t = jnp.exp(zt_shift)
    sum_t = jnp.sum(e_t, axis=ca, keepdims=True)

    z_s = s * inv_T - gt_off
    m_s = jnp.max(z_s, axis=ca, keepdims=True)
    lse_s = jnp.log(jnp.sum(jnp.exp(z_s - m_s), axis=ca, keepdims=True)) + m_s

    num = jnp.sum(e_t * (zt_shift - z_s), axis=ca, keepdims=True)
    # exact divide on the tiny reduced vector; the unit coefficient on the
    # (lse_s - log sum_t) term is exact by construction of the fusion.
    kl = num / sum_t + (lse_s - jnp.log(sum_t))

    # --- mask padded batch positions of a ragged last tile ---------------
    b_idx = (lax.broadcasted_iota(jnp.int32, ce.shape, ba)
             + pl.program_id(0) * s.shape[ba])
    valid = b_idx < batch
    ce = jnp.where(valid, ce, 0.0)     # where-select: NaN padding never escapes
    kl = jnp.where(valid, kl, 0.0)

    # per-tile partial (un-normalised); wrapper sums tiles and divides by B
    partial = jnp.sum(ce) + beta * (T * T) * jnp.sum(kl)
    out_ref[...] = jnp.full(out_ref.shape, partial, dtype=out_ref.dtype)


def _vmem_budget_and_limit():
    """Working-set budget + scoped-VMEM limit derived from the device."""
    try:
        cap = int(pltpu.get_tpu_info().vmem_capacity_bytes)
    except Exception:
        cap = 64 * 1024 * 1024            # conservative fallback (v7x per-TC VMEM)
    budget = min(int(cap * 0.55), 64 * 1024 * 1024)   # v7x ~35 MiB; v5e/v6e 64 MiB
    limit = min(int(cap * 0.80), 96 * 1024 * 1024)    # v7x ~51 MiB; v5e/v6e 96 MiB
    return budget, limit


def lmd_loss(logits, targets, dg_logits, major_labels, *,
             tau=1.0, beta=1.0, tile_b=None, cast_inputs_to_bf16=False):
    """JAX/Pallas equivalent of LMD_Loss(num_classes, tau, beta).forward(...)."""
    B, C = logits.shape

    # major-label mask -> 1000*mask offset, computed once in the wrapper
    lm = (jnp.sum(jax.nn.one_hot(major_labels.reshape(-1), C, dtype=jnp.float32),
                  axis=0) > 0).astype(jnp.float32)
    lm_off = 1000.0 * lm                                         # (C,)

    if cast_inputs_to_bf16:
        # v5e is HBM-bound here: halve bytes moved; in-kernel compute stays f32
        # and the 1000-offset masking is insensitive to bf16 logit precision.
        logits = logits.astype(jnp.bfloat16)
        dg_logits = dg_logits.astype(jnp.bfloat16)

    in_itemsize = max(jnp.dtype(logits.dtype).itemsize,
                      jnp.dtype(dg_logits.dtype).itemsize)
    budget, vmem_limit = _vmem_budget_and_limit()

    # working-set bytes per batch element:
    #   2 inputs x 2 pipeline buffers (native dtype) + ~7 live f32 (C,) temps
    bytes_per_elem = C * (2 * 2 * in_itemsize + 7 * 4) + 16

    # Layout choice: batch lane-dense (transposed) when C << 128 and a
    # minimum-width 128-column tile fits the budget; otherwise keep the
    # class-lane-dense layout (better for very large C: 8-row granularity).
    transposed = (C < 128) and (bytes_per_elem * min(B, 128) <= budget)
    gran = 128 if transposed else 8           # lane vs. sublane tile granularity

    if tile_b is not None:
        tb = B if tile_b >= B else max(gran, (tile_b // gran) * gran)
        if tb >= B:
            tb = B
    else:
        elems = max(int(budget // bytes_per_elem), gran)   # prefer fewest tiles
        tb = B if elems >= B else (elems // gran) * gran
    num_tiles = pl.cdiv(B, tb)

    tgt = targets.reshape(-1).astype(jnp.int32)
    if transposed:
        class_axis = 0
        s_in, t_in = logits.T, dg_logits.T                 # (C, B): batch on lanes
        tgt_in = tgt.reshape(1, B)
        lm_in = lm_off.reshape(C, 1)
        in_specs = [
            pl.BlockSpec((C, tb), lambda i: (0, i)),       # student logits
            pl.BlockSpec((C, tb), lambda i: (0, i)),       # teacher logits
            pl.BlockSpec((1, tb), lambda i: (0, i)),       # targets
            pl.BlockSpec((C, 1), lambda i: (0, 0)),        # label offset (resident)
        ]
    else:
        class_axis = 1
        s_in, t_in = logits, dg_logits                     # (B, C): class on lanes
        tgt_in = tgt.reshape(B, 1)
        lm_in = lm_off.reshape(1, C)
        in_specs = [
            pl.BlockSpec((tb, C), lambda i: (i, 0)),
            pl.BlockSpec((tb, C), lambda i: (i, 0)),
            pl.BlockSpec((tb, 1), lambda i: (i, 0)),
            pl.BlockSpec((1, C), lambda i: (0, 0)),
        ]

    kernel = functools.partial(
        _lmd_loss_kernel, T=float(tau), beta=float(beta), batch=B,
        class_axis=class_axis)

    # TODO(synk): on v7x, verify with xprof that the batch grid shards across
    # both TensorCores; if one TC idles, switch this axis to pltpu.CORE_PARALLEL.
    out = pl.pallas_call(
        kernel,
        grid=(num_tiles,),
        out_shape=jax.ShapeDtypeStruct((num_tiles, 8, 128), jnp.float32),
        in_specs=in_specs,
        out_specs=pl.BlockSpec((1, 8, 128), lambda i: (i, 0, 0)),
        compiler_params=pltpu.CompilerParams(
            dimension_semantics=("parallel",),
            vmem_limit_bytes=vmem_limit),
    )(s_in, t_in, tgt_in, lm_in)

    # tiny cross-tile reduction + batch-mean normalisation in the wrapper
    return jnp.sum(out[:, 0, 0]) / B


def _ref_loss(logits, targets, dg_logits, major_labels, tau, beta):
    # Pure-JAX reference mirroring the PyTorch module.
    B, C = logits.shape
    logits = logits.astype(jnp.float32)
    dg_logits = dg_logits.astype(jnp.float32)
    gt = jax.nn.one_hot(targets, C, dtype=jnp.float32)
    lmk = (jnp.sum(jax.nn.one_hot(major_labels, C, dtype=jnp.float32), axis=0) > 0
           ).astype(jnp.float32)[None, :]
    log_p = jax.nn.log_softmax(logits, axis=1)
    ce = -jnp.mean(jnp.sum(gt * log_p, axis=1))
    z_t = dg_logits / tau - 1000.0 * lmk - 1000.0 * gt
    p_t = jax.nn.softmax(z_t, axis=1)
    log_p_t = jax.nn.log_softmax(z_t, axis=1)
    z_s = logits / tau - 1000.0 * gt
    log_p_s = jax.nn.log_softmax(z_s, axis=1)
    kl = jnp.sum(p_t * (log_p_t - log_p_s)) / B
    return ce + beta * kl * tau ** 2


if __name__ == "__main__":
    tau, beta = 2.0, 1.0
    key = jax.random.PRNGKey(0)

    # --- case 1: small C (batch-lane-dense layout), single tile ----------
    B, C = 8, 10
    k1, k2, k3 = jax.random.split(key, 3)
    logits = jax.random.normal(k1, (B, C), dtype=jnp.float32)
    dg_logits = jax.random.normal(k2, (B, C), dtype=jnp.float32)
    targets = jax.random.randint(k3, (B,), 0, C, dtype=jnp.int32)
    major_labels = jnp.array([0, 3, 7], dtype=jnp.int32)

    loss = lmd_loss(logits, targets, dg_logits, major_labels, tau=tau, beta=beta)
    loss = jax.block_until_ready(loss)
    ref = _ref_loss(logits, targets, dg_logits, major_labels, tau, beta)
    assert jnp.allclose(loss, ref, atol=2e-3, rtol=2e-3), (loss, ref)

    # --- case 2: transposed multi-tile grid with a ragged last tile ------
    B2, C2 = 300, 10
    k4, k5, k6 = jax.random.split(k1, 3)
    logits2 = jax.random.normal(k4, (B2, C2), dtype=jnp.float32)
    dg_logits2 = jax.random.normal(k5, (B2, C2), dtype=jnp.float32)
    targets2 = jax.random.randint(k6, (B2,), 0, C2, dtype=jnp.int32)
    major2 = jnp.array([1, 4, 9], dtype=jnp.int32)

    loss2 = lmd_loss(logits2, targets2, dg_logits2, major2,
                     tau=tau, beta=beta, tile_b=128)
    loss2 = jax.block_until_ready(loss2)
    ref2 = _ref_loss(logits2, targets2, dg_logits2, major2, tau, beta)
    assert jnp.allclose(loss2, ref2, atol=2e-3, rtol=2e-3), (loss2, ref2)

    # --- case 3: large-C fallback (class-lane-dense layout), single tile --
    B3, C3 = 16, 256
    k7, k8, k9 = jax.random.split(k2, 3)
    logits3 = jax.random.normal(k7, (B3, C3), dtype=jnp.float32)
    dg_logits3 = jax.random.normal(k8, (B3, C3), dtype=jnp.float32)
    targets3 = jax.random.randint(k9, (B3,), 0, C3, dtype=jnp.int32)
    major3 = jnp.array([2, 17, 130, 200], dtype=jnp.int32)

    loss3 = lmd_loss(logits3, targets3, dg_logits3, major3, tau=tau, beta=beta)
    loss3 = jax.block_until_ready(loss3)
    ref3 = _ref_loss(logits3, targets3, dg_logits3, major3, tau, beta)
    assert jnp.allclose(loss3, ref3, atol=2e-3, rtol=2e-3), (loss3, ref3)

    print("KERNEL_OK")
</pallas_src>

<mosaic_0001>
module attributes {stable_mosaic.version = 11 : i64} {
  func.func @_lmd_loss_kernel(%arg0: i32, %arg1: memref<10x8xf32, #tpu.memory_space<vmem>>, %arg2: memref<10x8xf32, #tpu.memory_space<vmem>>, %arg3: memref<1x8xi32, #tpu.memory_space<vmem>>, %arg4: memref<10x1xf32, #tpu.memory_space<vmem>>, %arg5: memref<1x8x128xf32, #tpu.memory_space<vmem>>) attributes {dimension_semantics = [#tpu.dimension_semantics<parallel>], iteration_bounds = array<i64: 1>, scalar_prefetch = 0 : i64, scratch_operands = 0 : i64, tpu.core_type = #tpu.core_type<tc>, window_params = [{transform_indices = @transform_0, window_bounds = array<i64: 10, 8>}, {transform_indices = @transform_1, window_bounds = array<i64: 10, 8>}, {transform_indices = @transform_2, window_bounds = array<i64: 1, 8>}, {pipeline_mode = #tpu.pipeline_mode<synchronous>, transform_indices = @transform_3, window_bounds = array<i64: 10, 1>}, {transform_indices = @transform_4, window_bounds = array<i64: 1, 8, 128>}]} {
    %c0 = arith.constant 0 : index
    %c0_0 = arith.constant 0 : index
    %0 = vector.load %arg1[%c0, %c0_0] : memref<10x8xf32, #tpu.memory_space<vmem>>, vector<10x8xf32>
    %c0_1 = arith.constant 0 : index
    %c0_2 = arith.constant 0 : index
    %1 = vector.load %arg2[%c0_1, %c0_2] : memref<10x8xf32, #tpu.memory_space<vmem>>, vector<10x8xf32>
    %2 = tpu.iota {dimensions = array<i32: 0>} : vector<10x8xi32>
    %c0_3 = arith.constant 0 : index
    %c0_4 = arith.constant 0 : index
    %3 = vector.load %arg3[%c0_3, %c0_4] : memref<1x8xi32, #tpu.memory_space<vmem>>, vector<1x8xi32>
    %4 = vector.broadcast %3 : vector<1x8xi32> to vector<10x8xi32>
    %5 = arith.cmpi eq, %2, %4 : vector<10x8xi32>
    %6 = arith.extui %5 : vector<10x8xi1> to vector<10x8xi32>
    %7 = arith.sitofp %6 : vector<10x8xi32> to vector<10x8xf32>
    %cst = arith.constant 1.000000e+03 : f32
    %8 = vector.broadcast %cst : f32 to vector<10x8xf32>
    %9 = arith.mulf %8, %7 : vector<10x8xf32>
    %c0_5 = arith.constant 0 : index
    %c0_6 = arith.constant 0 : index
    %10 = vector.load %arg4[%c0_5, %c0_6] : memref<10x1xf32, #tpu.memory_space<vmem>>, vector<10x1xf32>
    %11 = vector.broadcast %10 : vector<10x1xf32> to vector<10x8xf32>
    %12 = arith.addf %9, %11 : vector<10x8xf32>
    %cst_7 = arith.constant dense<0xFF800000> : vector<8xf32>
    %13 = vector.multi_reduction <maximumf>, %0, %cst_7 [0] : vector<10x8xf32> to vector<8xf32>
    %14 = vector.shape_cast %13 : vector<8xf32> to vector<1x8xf32>
    %15 = vector.broadcast %14 : vector<1x8xf32> to vector<10x8xf32>
    %16 = arith.subf %0, %15 : vector<10x8xf32>
    %17 = math.exp %16 : vector<10x8xf32>
    %cst_8 = arith.constant dense<0.000000e+00> : vector<8xf32>
    %18 = vector.multi_reduction <add>, %17, %cst_8 [0] : vector<10x8xf32> to vector<8xf32>
    %19 = vector.shape_cast %18 : vector<8xf32> to vector<1x8xf32>
    %20 = math.log %19 : vector<1x8xf32>
    %21 = arith.addf %20, %14 : vector<1x8xf32>
    %22 = arith.mulf %7, %0 : vector<10x8xf32>
    %cst_9 = arith.constant dense<0.000000e+00> : vector<8xf32>
    %23 = vector.multi_reduction <add>, %22, %cst_9 [0] : vector<10x8xf32> to vector<8xf32>
    %24 = vector.shape_cast %23 : vector<8xf32> to vector<1x8xf32>
    %25 = arith.subf %21, %24 : vector<1x8xf32>
    %cst_10 = arith.constant 5.000000e-01 : f32
    %26 = vector.broadcast %cst_10 : f32 to vector<10x8xf32>
    %27 = arith.mulf %1, %26 : vector<10x8xf32>
    %28 = arith.subf %27, %12 : vector<10x8xf32>
    %cst_11 = arith.constant dense<0xFF800000> : vector<8xf32>
    %29 = vector.multi_reduction <maximumf>, %28, %cst_11 [0] : vector<10x8xf32> to vector<8xf32>
    %30 = vector.shape_cast %29 : vector<8xf32> to vector<1x8xf32>
    %31 = vector.broadcast %30 : vector<1x8xf32> to vector<10x8xf32>
    %32 = arith.subf %28, %31 : vector<10x8xf32>
    %33 = math.exp %32 : vector<10x8xf32>
    %cst_12 = arith.constant dense<0.000000e+00> : vector<8xf32>
    %34 = vector.multi_reduction <add>, %33, %cst_12 [0] : vector<10x8xf32> to vector<8xf32>
    %35 = vector.shape_cast %34 : vector<8xf32> to vector<1x8xf32>
    %cst_13 = arith.constant 5.000000e-01 : f32
    %36 = vector.broadcast %cst_13 : f32 to vector<10x8xf32>
    %37 = arith.mulf %0, %36 : vector<10x8xf32>
    %38 = arith.subf %37, %9 : vector<10x8xf32>
    %cst_14 = arith.constant dense<0xFF800000> : vector<8xf32>
    %39 = vector.multi_reduction <maximumf>, %38, %cst_14 [0] : vector<10x8xf32> to vector<8xf32>
    %40 = vector.shape_cast %39 : vector<8xf32> to vector<1x8xf32>
    %41 = vector.broadcast %40 : vector<1x8xf32> to vector<10x8xf32>
    %42 = arith.subf %38, %41 : vector<10x8xf32>
    %43 = math.exp %42 : vector<10x8xf32>
    %cst_15 = arith.constant dense<0.000000e+00> : vector<8xf32>
    %44 = vector.multi_reduction <add>, %43, %cst_15 [0] : vector<10x8xf32> to vector<8xf32>
    %45 = vector.shape_cast %44 : vector<8xf32> to vector<1x8xf32>
    %46 = math.log %45 : vector<1x8xf32>
    %47 = arith.addf %46, %40 : vector<1x8xf32>
    %48 = arith.subf %32, %38 : vector<10x8xf32>
    %49 = arith.mulf %33, %48 : vector<10x8xf32>
    %cst_16 = arith.constant dense<0.000000e+00> : vector<8xf32>
    %50 = vector.multi_reduction <add>, %49, %cst_16 [0] : vector<10x8xf32> to vector<8xf32>
    %51 = vector.shape_cast %50 : vector<8xf32> to vector<1x8xf32>
    %52 = arith.divf %51, %35 : vector<1x8xf32>
    %53 = math.log %35 : vector<1x8xf32>
    %54 = arith.subf %47, %53 : vector<1x8xf32>
    %55 = arith.addf %52, %54 : vector<1x8xf32>
    %56 = tpu.iota {dimensions = array<i32: 1>} : vector<1x8xi32>
    %c8_i32 = arith.constant 8 : i32
    %57 = arith.muli %arg0, %c8_i32 : i32
    %58 = vector.broadcast %57 : i32 to vector<1x8xi32>
    %59 = arith.addi %56, %58 : vector<1x8xi32>
    %c8_i32_17 = arith.constant 8 : i32
    %60 = vector.broadcast %c8_i32_17 : i32 to vector<1x8xi32>
    %61 = arith.cmpi slt, %59, %60 : vector<1x8xi32>
    %cst_18 = arith.constant 0.000000e+00 : f32
    %62 = vector.broadcast %cst_18 : f32 to vector<1x8xf32>
    %63 = arith.select %61, %25, %62 : vector<1x8xi1>, vector<1x8xf32>
    %cst_19 = arith.constant 0.000000e+00 : f32
    %64 = vector.broadcast %cst_19 : f32 to vector<1x8xf32>
    %65 = arith.select %61, %55, %64 : vector<1x8xi1>, vector<1x8xf32>
    %66 = vector.shape_cast %63 : vector<1x8xf32> to vector<1x1x8xf32>
    %cst_20 = arith.constant dense<0.000000e+00> : vector<1xf32>
    %67 = vector.multi_reduction <add>, %66, %cst_20 [1, 2] : vector<1x1x8xf32> to vector<1xf32>
    %68 = vector.shape_cast %67 : vector<1xf32> to vector<1x1x1xf32>
    %69 = vector.extract %68[0, 0, 0] : f32 from vector<1x1x1xf32>
    %70 = vector.shape_cast %65 : vector<1x8xf32> to vector<1x1x8xf32>
    %cst_21 = arith.constant dense<0.000000e+00> : vector<1xf32>
    %71 = vector.multi_reduction <add>, %70, %cst_21 [1, 2] : vector<1x1x8xf32> to vector<1xf32>
    %72 = vector.shape_cast %71 : vector<1xf32> to vector<1x1x1xf32>
    %73 = vector.extract %72[0, 0, 0] : f32 from vector<1x1x1xf32>
    %cst_22 = arith.constant 4.000000e+00 : f32
    %74 = arith.mulf %cst_22, %73 : f32
    %75 = arith.addf %69, %74 : f32
    %76 = vector.broadcast %75 : f32 to vector<1x8x128xf32>
    %c0_23 = arith.constant 0 : index
    %c0_24 = arith.constant 0 : index
    %c0_25 = arith.constant 0 : index
    %77 = vector.load %arg5[%c0_23, %c0_24, %c0_25] : memref<1x8x128xf32, #tpu.memory_space<vmem>>, vector<1x8x128xf32>
    tpu.vector_store %arg5[%c0_23, %c0_24, %c0_25], %76 {strides = array<i32>} : memref<1x8x128xf32, #tpu.memory_space<vmem>>, vector<1x8x128xf32>,
    return
  }
  func.func @transform_0(%arg0: i32) -> (i32, i32) {
    %c0_i32 = arith.constant 0 : i32
    %c0_i32_0 = arith.constant 0 : i32
    return %c0_i32, %arg0 : i32, i32
  }
  func.func @transform_1(%arg0: i32) -> (i32, i32) {
    %c0_i32 = arith.constant 0 : i32
    %c0_i32_0 = arith.constant 0 : i32
    return %c0_i32, %arg0 : i32, i32
  }
  func.func @transform_2(%arg0: i32) -> (i32, i32) {
    %c0_i32 = arith.constant 0 : i32
    %c0_i32_0 = arith.constant 0 : i32
    return %c0_i32, %arg0 : i32, i32
  }
  func.func @transform_3(%arg0: i32) -> (i32, i32) {
    %c0_i32 = arith.constant 0 : i32
    %c0_i32_0 = arith.constant 0 : i32
    %c0_i32_1 = arith.constant 0 : i32
    return %c0_i32, %c0_i32_0 : i32, i32
  }
  func.func @transform_4(%arg0: i32) -> (i32, i32, i32) {
    %c0_i32 = arith.constant 0 : i32
    %c0_i32_0 = arith.constant 0 : i32
    %c0_i32_1 = arith.constant 0 : i32
    return %arg0, %c0_i32, %c0_i32_0 : i32, i32, i32
  }
}

</mosaic_0001>

<llo_original>
// kernel: tpu_custom_call.1
$region0: #{tpu_custom_call.1}
  #allocation0 [shape = 'u32[]', space=smem, size = 0x4, offset = 0x4, fixed_abs, tag = 'smem constant byte address 0x4 - core index']
  #allocation1 [shape = 'u32[144,128]{1,0:T(1,128)}', space=vmem, size = 0x12000, scoped, tag = 'internal scratch']
  %s0 = inlined_call_operand.vmem [shape: f32[10,8], index: 0, kind: input, shape index: {}]
  %s1 = inlined_call_operand.vmem [shape: f32[10,8], index: 1, kind: input, shape index: {}]
  %s2 = inlined_call_operand.vmem [shape: s32[1,8], index: 2, kind: input, shape index: {}]
  %s3 = inlined_call_operand.vmem [shape: f32[10,1], index: 3, kind: input, shape index: {}]
  %s4 = inlined_call_operand.hbm [shape: f32[1,8,128], index: 4, kind: output, shape index: {}]
  %s5 = sld [smem:[#allocation0]]
  $region26: #{tpu_custom_call.1} parent=0
    _
  %s7 = ssub.s32 1, %s5
  %s8 = scalar_select 0, %s7, %s5
  $region1: #{tpu_custom_call.1} parent=0
    #allocation2 [shape = 'u8[4096]{0}', space=vmem, size = 0x1000, scoped, tag = 'output window, operand 0, single buffered']
    #allocation3 [shape = 's32[1]{0}', space=sflag, size = 0x4, scoped, tag = 'scoped memory for tpu_custom_call.1']
    %9 = vsyncpa [#allocation3], 0
    // Predicated region
    $region2: #{tpu_custom_call.1} parent=1 // pred_check
      _
    $region3: #{tpu_custom_call.1} parent=1 // pred_check_branch
      %11 = sbr.rel (0) target = $region5
    $region4: #{tpu_custom_call.1} parent=1 // pred_region
      _
    $region5: #{tpu_custom_call.1} parent=1 // pred_fallthru
      _
    // Predicated region
    $region6: #{tpu_custom_call.1} parent=1 // pred_check
      _
    $region7: #{tpu_custom_call.1} parent=1 // pred_check_branch
      %13 = sbr.rel (0) target = $region9
    $region8: #{tpu_custom_call.1} parent=1 // pred_region
      _
    $region9: #{tpu_custom_call.1} parent=1 // pred_fallthru
      _
    // Predicated region
    $region10: #{tpu_custom_call.1} parent=1 // pred_check
      _
    $region11: #{tpu_custom_call.1} parent=1 // pred_check_branch
      %15 = sbr.rel (0) target = $region13
    $region12: #{tpu_custom_call.1} parent=1 // pred_region
      _
    $region13: #{tpu_custom_call.1} parent=1 // pred_fallthru
      _
    // Predicated region
    $region14: #{tpu_custom_call.1} parent=1 // pred_check
      _
    $region15: #{tpu_custom_call.1} parent=1 // pred_check_branch
      %17 = sbr.rel (0) target = $region17
    $region16: #{tpu_custom_call.1} parent=1 // pred_region
      _
    $region17: #{tpu_custom_call.1} parent=1 // pred_fallthru
      _
    %v18 = vld [vmem:[%s0] sm:$0xff]
    %v19 = vld [vmem:[%s0 + $0x8] sm:$0x3]
    %v20 = vld [vmem:[%s1] sm:$0xff]
    %v21 = vld [vmem:[%s1 + $0x8] sm:$0x3]
    %v22 = vlaneseq
    %v23 = vshrl.u32 %v22, 7
    %v24 = vadd.s32 %v23, 8
    %v25 = vld [vmem:[%s2] sm:$0x1]
    %v26 = vlaneseq
    %v27 = vshrl.u32 %v26, 7
    %v28 = vsub.s32 0, %v27
    %v29 = vrot.slane %v25, %v28
    %vm30 = vcmp.eq.s32.totalorder %v23, %v29
    %vm31 = vcmp.eq.s32.totalorder %v24, %v29
    %v32 = vsel %vm30, 1, 0
    %v33 = vsel %vm31, 1, 0
    %v34 = vcvt.s32.f32 %v32
    %v35 = vcvt.s32.f32 %v33
    %v36 = vmul.f32 %v34, 1000.0
    %v37 = vmul.f32 %v35, 1000.0
    %v38 = vld [vmem:[%s3] sm:$0xff]
    %v39 = vld [vmem:[%s3 + $0x8] sm:$0x3]
    %41 = vset.pattern.permute.xlu0 0
    %42 = vperm.xlu0 %41, %v38
    %v43 = vpop.permute.xlu0 %42
    %46 = vset.pattern.permute.xlu0 0
    %47 = vperm.xlu0 %46, %v39
    %v48 = vpop.permute.xlu0 %47
    %v50 = vadd.f32 %v36, %v43
    %v51 = vadd.f32 %v37, %v48
    %vm52 = vcmask 64512
    %v53 = vsel %vm52, %v18, -inf
    %vm54 = vcmask 58368
    %v55 = vsel %vm54, %v19, -inf
    %v56 = vmax.f32 %v53, %v55
    %v57 = vrot.slane %v56, 4
    %v58 = vmax.f32 %v56, %v57
    %v59 = vrot.slane %v58, 2
    %v60 = vmax.f32 %v58, %v59
    %v61 = vrot.slane %v60, 1
    %v62 = vmax.f32 %v60, %v61
    %v63 = vsub.f32 %v18, %v62
    %v64 = vsub.f32 %v19, %v62
    %v65 = vmul.f32 %v63, 1.442695
    %v66 = vpow.pop %v65
    %v67 = vmul.f32 %v64, 1.442695
    %v68 = vpow.pop %v67
    %v69 = vsel %vm52, %v66, 0.0
    %v70 = vsel %vm54, %v68, 0.0
    %v71 = vadd.f32 %v69, %v70
    %v72 = vrot.slane %v71, 4
    %v73 = vadd.f32 %v71, %v72
    %v74 = vrot.slane %v73, 2
    %v75 = vadd.f32 %v73, %v74
    %v76 = vrot.slane %v75, 1
    %v77 = vadd.f32 %v75, %v76
    %v78 = vlog2.pop %v77
    %v79 = vmul.f32 %v78, 0.6931472
    %v80 = vadd.f32 %v79, %v62
    %v81 = vmul.f32 %v34, %v18
    %v82 = vmul.f32 %v35, %v19
    %v83 = vsel %vm52, %v81, 0.0
    %v84 = vsel %vm54, %v82, 0.0
    %v85 = vadd.f32 %v83, %v84
    %v86 = vrot.slane %v85, 4
    %v87 = vadd.f32 %v85, %v86
    %v88 = vrot.slane %v87, 2
    %v89 = vadd.f32 %v87, %v88
    %v90 = vrot.slane %v89, 1
    %v91 = vadd.f32 %v89, %v90
    %v92 = vsub.f32 %v80, %v91
    %v93 = vmul.f32 %v20, 0.5
    %v94 = vmul.f32 %v21, 0.5
    %v95 = vsub.f32 %v93, %v50
    %v96 = vsub.f32 %v94, %v51
    %v97 = vsel %vm52, %v95, -inf
    %v98 = vsel %vm54, %v96, -inf
    %v99 = vmax.f32 %v97, %v98
    %v100 = vrot.slane %v99, 4
    %v101 = vmax.f32 %v99, %v100
    %v102 = vrot.slane %v101, 2
    %v103 = vmax.f32 %v101, %v102
    %v104 = vrot.slane %v103, 1
    %v105 = vmax.f32 %v103, %v104
    %v106 = vsub.f32 %v95, %v105
    %v107 = vsub.f32 %v96, %v105
    %v108 = vmul.f32 %v106, 1.442695
    %v109 = vpow.pop %v108
    %v110 = vmul.f32 %v107, 1.442695
    %v111 = vpow.pop %v110
    %v112 = vsel %vm52, %v109, 0.0
    %v113 = vsel %vm54, %v111, 0.0
    %v114 = vadd.f32 %v112, %v113
    %v115 = vrot.slane %v114, 4
    %v116 = vadd.f32 %v114, %v115
    %v117 = vrot.slane %v116, 2
    %v118 = vadd.f32 %v116, %v117
    %v119 = vrot.slane %v118, 1
    %v120 = vadd.f32 %v118, %v119
    %v121 = vmul.f32 %v18, 0.5
    %v122 = vmul.f32 %v19, 0.5
    %v123 = vsub.f32 %v121, %v36
    %v124 = vsub.f32 %v122, %v37
    %v125 = vsel %vm52, %v123, -inf
    %v126 = vsel %vm54, %v124, -inf
    %v127 = vmax.f32 %v125, %v126
    %v128 = vrot.slane %v127, 4
    %v129 = vmax.f32 %v127, %v128
    %v130 = vrot.slane %v129, 2
    %v131 = vmax.f32 %v129, %v130
    %v132 = vrot.slane %v131, 1
    %v133 = vmax.f32 %v131, %v132
    %v134 = vsub.f32 %v123, %v133
    %v135 = vsub.f32 %v124, %v133
    %v136 = vmul.f32 %v134, 1.442695
    %v137 = vpow.pop %v136
    %v138 = vmul.f32 %v135, 1.442695
    %v139 = vpow.pop %v138
    %v140 = vsel %vm52, %v137, 0.0
    %v141 = vsel %vm54, %v139, 0.0
    %v142 = vadd.f32 %v140, %v141
    %v143 = vrot.slane %v142, 4
    %v144 = vadd.f32 %v142, %v143
    %v145 = vrot.slane %v144, 2
    %v146 = vadd.f32 %v144, %v145
    %v147 = vrot.slane %v146, 1
    %v148 = vadd.f32 %v146, %v147
    %v149 = vlog2.pop %v148
    %v150 = vmul.f32 %v149, 0.6931472
    %v151 = vadd.f32 %v150, %v133
    %v152 = vsub.f32 %v106, %v123
    %v153 = vsub.f32 %v107, %v124
    %v154 = vmul.f32 %v109, %v152
    %v155 = vmul.f32 %v111, %v153
    %v156 = vsel %vm52, %v154, 0.0
    %v157 = vsel %vm54, %v155, 0.0
    %v158 = vadd.f32 %v156, %v157
    %v159 = vrot.slane %v158, 4
    %v160 = vadd.f32 %v158, %v159
    %v161 = vrot.slane %v160, 2
    %v162 = vadd.f32 %v160, %v161
    %v163 = vrot.slane %v162, 1
    %v164 = vadd.f32 %v162, %v163
    %v165 = vrcp.pop %v120
    %v166 = vmul.f32 %v164, %v165
    %v167 = vlog2.pop %v120
    %v168 = vmul.f32 %v167, 0.6931472
    %v169 = vsub.f32 %v151, %v168
    %v170 = vadd.f32 %v166, %v169
    %v171 = vlaneseq
    %v172 = vand.u32 %v171, 127
    %s173 = smul.u32 0, 8
    %v174 = vstv %s173
    %v175 = vadd.s32 %v172, %v174
    %vm176 = vcmp.lt.s32.totalorder %v175, 8
    %v177 = vsel %vm176, %v92, 0.0
    %v178 = vsel %vm176, %v170, 0.0
    %vm179 = vcmask 57344
    %v180 = vsel %vm179, %v177, 0.0
    %181 = vadd.xlane.f32.xlu0 %v180
    %v182 = vpop.xlane.xlu0 %181
    %v183 = vrot.slane %v182, 4
    %v184 = vadd.f32 %v182, %v183
    %v185 = vrot.slane %v184, 2
    %v186 = vadd.f32 %v184, %v185
    %v187 = vrot.slane %v186, 1
    %v188 = vadd.f32 %v186, %v187
    %s189 = vtos %v188
    %v190 = vsel %vm179, %v178, 0.0
    %191 = vadd.xlane.f32.xlu0 %v190
    %v192 = vpop.xlane.xlu0 %191
    %v193 = vrot.slane %v192, 4
    %v194 = vadd.f32 %v192, %v193
    %v195 = vrot.slane %v194, 2
    %v196 = vadd.f32 %v194, %v195
    %v197 = vrot.slane %v196, 1
    %v198 = vadd.f32 %v196, %v197
    %s199 = vtos %v198
    %s200 = smul.f32 %s199, 4.0
    %s201 = sadd.f32 %s189, %s200
    %v202 = vstv %s201
    %203 = vst [vmem:[#allocation2] sm:$0xff] %v202
    // Predicated region
    $region18: #{tpu_custom_call.1} parent=1 // pred_check
      _
    $region19: #{tpu_custom_call.1} parent=1 // pred_check_branch
      %205 = sbr.rel (0) target = $region21
    $region20: #{tpu_custom_call.1} parent=1 // pred_region
      %s207 = ssub.s32 128, 128
      %208 = vsyncadd [#allocation3], %s207
      %s210 = sshll.u32 [#allocation2], 4
      %s211 = int_to_ptr.vmem [resolvable:$true] %s210
      %213 = dma.vmem_to_hbm [thread:$0]  %s211, 128, %s4, [#allocation3]
    $region21: #{tpu_custom_call.1} parent=1 // pred_fallthru
      _
    // Predicated region
    $region22: #{tpu_custom_call.1} parent=1 // pred_check
      _
    $region23: #{tpu_custom_call.1} parent=1 // pred_check_branch
      %215 = sbr.rel (0) target = $region25
    $region24: #{tpu_custom_call.1} parent=1 // pred_region
      %216 = dma.done [#allocation3], 128
    $region25: #{tpu_custom_call.1} parent=1 // pred_fallthru
      _
    %217 = vsyncpa [#allocation3], 1

</llo_original>
